<compile_context>
chip_gen: v6e
topology: v6e:2x2x1
jax: 0.10.0
libtpu: 0.0.40
codegen_flags: <defaults>
</compile_context>

<pallas_src>
import functools

import jax
import jax.numpy as jnp
from jax.experimental import pallas as pl
from jax.experimental.pallas import tpu as pltpu

EPS = 1e-5  # nn.LayerNorm default


def _round_up(x, m):
    return (x + m - 1) // m * m


def prenorm_kernel(x_ref, gamma_ref, beta_ref, wT_ref, b_ref, o_ref, *,
                   d_true, d_pad):
    # x_ref: (tm, d_pad) block of the flattened (zero-padded) input.
    x = x_ref[...].astype(jnp.float32)

    # LayerNorm over the last axis (biased variance, like torch.nn.LayerNorm).
    # When D was padded to a multiple of 128, mask the padded lanes out of the
    # mean/variance so statistics match the true feature width.
    if d_pad != d_true:
        lane = jax.lax.broadcasted_iota(jnp.int32, x.shape, 1)
        valid = lane < d_true
        xm = jnp.where(valid, x, 0.0)
    else:
        xm = x

    inv_d = jnp.float32(1.0 / d_true)
    mean = jnp.sum(xm, axis=-1, keepdims=True) * inv_d
    xc = xm - mean
    if d_pad != d_true:
        xc = jnp.where(valid, xc, 0.0)
    var = jnp.sum(xc * xc, axis=-1, keepdims=True) * inv_d
    inv = jax.lax.rsqrt(var + EPS)
    # gamma/beta are zero on padded lanes, so y == 0 there and padded rows of
    # the (pre-transposed, zero-padded) weight contribute nothing.
    y = xc * inv * gamma_ref[...].astype(jnp.float32) \
        + beta_ref[...].astype(jnp.float32)

    # fn = Linear(D -> D):  out = y @ W^T + b.  W was transposed once in the
    # wrapper, so this is a plain dot; feed the MXU in the weight's native
    # dtype with f32 accumulation.
    out = jnp.dot(y.astype(wT_ref.dtype), wT_ref[...],
                  preferred_element_type=jnp.float32)
    out = out + b_ref[...].astype(jnp.float32)
    o_ref[...] = out.astype(o_ref.dtype)


@functools.partial(jax.jit, static_argnames=("tile_rows", "tile_n"))
def prenorm(x, gamma, beta, w, b, *, tile_rows=256, tile_n=512):
    B, N, D = x.shape
    rows = B * N

    # Lane-dense feature dim (multiple of 128); row tile a multiple of 8,
    # capped by the (8-aligned) row count so tiny inputs stay tiny.
    d_pad = _round_up(max(D, 1), 128)
    tm = min(tile_rows, _round_up(rows, 8))
    tm = _round_up(tm, 8)
    rows_pad = _round_up(rows, tm)
    tn = min(tile_n, d_pad)
    while d_pad % tn:          # tn must evenly tile d_pad; 128 always does
        tn -= 128

    x2 = x.reshape(rows, D)
    if rows_pad != rows or d_pad != D:
        x2 = jnp.pad(x2, ((0, rows_pad - rows), (0, d_pad - D)))
    gamma2 = jnp.pad(gamma.reshape(1, D), ((0, 0), (0, d_pad - D)))
    beta2 = jnp.pad(beta.reshape(1, D), ((0, 0), (0, d_pad - D)))
    b2 = jnp.pad(b.reshape(1, D), ((0, 0), (0, d_pad - D)))
    # Pre-transpose the weight once (torch Linear stores W as (out, in)).
    wT = jnp.pad(w.T, ((0, d_pad - D), (0, d_pad - D)))

    kernel = functools.partial(prenorm_kernel, d_true=D, d_pad=d_pad)

    out = pl.pallas_call(
        kernel,
        out_shape=jax.ShapeDtypeStruct((rows_pad, d_pad), x.dtype),
        grid_spec=pltpu.PrefetchScalarGridSpec(
            num_scalar_prefetch=0,
            grid=(rows_pad // tm, d_pad // tn),
            in_specs=[
                pl.BlockSpec((tm, d_pad), lambda i, j: (i, 0)),   # x rows
                pl.BlockSpec((1, d_pad), lambda i, j: (0, 0)),    # gamma
                pl.BlockSpec((1, d_pad), lambda i, j: (0, 0)),    # beta
                pl.BlockSpec((d_pad, tn), lambda i, j: (0, j)),   # W^T (N-tiled)
                pl.BlockSpec((1, tn), lambda i, j: (0, j)),       # bias
            ],
            out_specs=pl.BlockSpec((tm, tn), lambda i, j: (i, j)),
        ),
        compiler_params=pltpu.CompilerParams(
            dimension_semantics=("parallel", "parallel"),
            vmem_limit_bytes=64 * 1024 * 1024,
        ),
    )(x2, gamma2, beta2, wT, b2)

    return out[:rows, :D].reshape(B, N, D)


def prenorm_ref(x, gamma, beta, w, b):
    xf = x.astype(jnp.float32)
    mean = jnp.mean(xf, axis=-1, keepdims=True)
    var = jnp.mean((xf - mean) ** 2, axis=-1, keepdims=True)
    y = (xf - mean) * jax.lax.rsqrt(var + EPS) * gamma + beta
    return (y @ w.astype(jnp.float32).T + b).astype(x.dtype)


if __name__ == "__main__":
    B, N, D = 2, 8, 32
    key = jax.random.PRNGKey(0)
    kx, kw, kb = jax.random.split(key, 3)

    x = jax.random.normal(kx, (B, N, D), dtype=jnp.float32)
    # LayerNorm params (torch init: gamma=1, beta=0)
    gamma = jnp.ones((D,), jnp.float32)
    beta = jnp.zeros((D,), jnp.float32)
    # fn = Linear(D, D) params, deterministic init
    w = jax.random.normal(kw, (D, D), dtype=jnp.float32) * 0.05
    b = jax.random.normal(kb, (D,), dtype=jnp.float32) * 0.05

    out = prenorm(x, gamma, beta, w, b)
    jax.block_until_ready(out)

    ref = prenorm_ref(x, gamma, beta, w, b)
    assert out.shape == (B, N, D)
    assert jnp.allclose(out, ref, atol=1e-4, rtol=1e-4), "mismatch vs reference"
    print("KERNEL_OK")
</pallas_src>

<mosaic_0001>
module attributes {stable_mosaic.version = 11 : i64} {
  func.func @prenorm_kernel(%arg0: i32, %arg1: i32, %arg2: memref<16x128xf32, #tpu.memory_space<vmem>>, %arg3: memref<1x128xf32, #tpu.memory_space<vmem>>, %arg4: memref<1x128xf32, #tpu.memory_space<vmem>>, %arg5: memref<128x128xf32, #tpu.memory_space<vmem>>, %arg6: memref<1x128xf32, #tpu.memory_space<vmem>>, %arg7: memref<16x128xf32, #tpu.memory_space<vmem>>) attributes {dimension_semantics = [#tpu.dimension_semantics<parallel>, #tpu.dimension_semantics<parallel>], iteration_bounds = array<i64: 1, 1>, scalar_prefetch = 0 : i64, scratch_operands = 0 : i64, tpu.core_type = #tpu.core_type<tc>, window_params = [{transform_indices = @transform_0, window_bounds = array<i64: 16, 128>}, {pipeline_mode = #tpu.pipeline_mode<synchronous>, transform_indices = @transform_1, window_bounds = array<i64: 1, 128>}, {pipeline_mode = #tpu.pipeline_mode<synchronous>, transform_indices = @transform_2, window_bounds = array<i64: 1, 128>}, {transform_indices = @transform_3, window_bounds = array<i64: 128, 128>}, {transform_indices = @transform_4, window_bounds = array<i64: 1, 128>}, {transform_indices = @transform_5, window_bounds = array<i64: 16, 128>}]} {
    %c0 = arith.constant 0 : index
    %c0_0 = arith.constant 0 : index
    %0 = vector.load %arg2[%c0, %c0_0] : memref<16x128xf32, #tpu.memory_space<vmem>>, vector<16x128xf32>
    %1 = tpu.iota {dimensions = array<i32: 1>} : vector<16x128xi32>
    %c32_i32 = arith.constant 32 : i32
    %2 = vector.broadcast %c32_i32 : i32 to vector<16x128xi32>
    %3 = arith.cmpi slt, %1, %2 : vector<16x128xi32>
    %cst = arith.constant 0.000000e+00 : f32
    %4 = vector.broadcast %cst : f32 to vector<16x128xf32>
    %5 = arith.select %3, %0, %4 : vector<16x128xi1>, vector<16x128xf32>
    %cst_1 = arith.constant dense<0.000000e+00> : vector<16xf32>
    %6 = vector.multi_reduction <add>, %5, %cst_1 [1] : vector<16x128xf32> to vector<16xf32>
    %7 = vector.shape_cast %6 : vector<16xf32> to vector<16x1xf32>
    %cst_2 = arith.constant 3.125000e-02 : f32
    %8 = vector.broadcast %cst_2 : f32 to vector<16x1xf32>
    %9 = arith.mulf %7, %8 : vector<16x1xf32>
    %10 = vector.broadcast %9 : vector<16x1xf32> to vector<16x128xf32>
    %11 = arith.subf %5, %10 : vector<16x128xf32>
    %cst_3 = arith.constant 0.000000e+00 : f32
    %12 = vector.broadcast %cst_3 : f32 to vector<16x128xf32>
    %13 = arith.select %3, %11, %12 : vector<16x128xi1>, vector<16x128xf32>
    %14 = arith.mulf %13, %13 : vector<16x128xf32>
    %cst_4 = arith.constant dense<0.000000e+00> : vector<16xf32>
    %15 = vector.multi_reduction <add>, %14, %cst_4 [1] : vector<16x128xf32> to vector<16xf32>
    %16 = vector.shape_cast %15 : vector<16xf32> to vector<16x1xf32>
    %cst_5 = arith.constant 3.125000e-02 : f32
    %17 = vector.broadcast %cst_5 : f32 to vector<16x1xf32>
    %18 = arith.mulf %16, %17 : vector<16x1xf32>
    %cst_6 = arith.constant 9.99999974E-6 : f32
    %19 = vector.broadcast %cst_6 : f32 to vector<16x1xf32>
    %20 = arith.addf %18, %19 : vector<16x1xf32>
    %21 = math.rsqrt %20 : vector<16x1xf32>
    %22 = vector.broadcast %21 : vector<16x1xf32> to vector<16x128xf32>
    %23 = arith.mulf %13, %22 : vector<16x128xf32>
    %c0_7 = arith.constant 0 : index
    %c0_8 = arith.constant 0 : index
    %24 = vector.load %arg3[%c0_7, %c0_8] : memref<1x128xf32, #tpu.memory_space<vmem>>, vector<1x128xf32>
    %25 = vector.broadcast %24 : vector<1x128xf32> to vector<16x128xf32>
    %26 = arith.mulf %23, %25 : vector<16x128xf32>
    %c0_9 = arith.constant 0 : index
    %c0_10 = arith.constant 0 : index
    %27 = vector.load %arg4[%c0_9, %c0_10] : memref<1x128xf32, #tpu.memory_space<vmem>>, vector<1x128xf32>
    %28 = vector.broadcast %27 : vector<1x128xf32> to vector<16x128xf32>
    %29 = arith.addf %26, %28 : vector<16x128xf32>
    %c0_11 = arith.constant 0 : index
    %c0_12 = arith.constant 0 : index
    %30 = vector.load %arg5[%c0_11, %c0_12] : memref<128x128xf32, #tpu.memory_space<vmem>>, vector<128x128xf32>
    %cst_13 = arith.constant dense<0.000000e+00> : vector<16x128xf32>
    %31 = tpu.matmul %29, %30, %cst_13 {dimension_numbers = #tpu.dot_dimension_numbers<[1], [0], [0], [1], [0, 0, 1, 1], [], []>} : vector<16x128xf32>, vector<128x128xf32>, vector<16x128xf32> -> vector<16x128xf32>
    %c0_14 = arith.constant 0 : index
    %c0_15 = arith.constant 0 : index
    %32 = vector.load %arg6[%c0_14, %c0_15] : memref<1x128xf32, #tpu.memory_space<vmem>>, vector<1x128xf32>
    %33 = vector.broadcast %32 : vector<1x128xf32> to vector<16x128xf32>
    %34 = arith.addf %31, %33 : vector<16x128xf32>
    %c0_16 = arith.constant 0 : index
    %c0_17 = arith.constant 0 : index
    %35 = vector.load %arg7[%c0_16, %c0_17] : memref<16x128xf32, #tpu.memory_space<vmem>>, vector<16x128xf32>
    tpu.vector_store %arg7[%c0_16, %c0_17], %34 {strides = array<i32>} : memref<16x128xf32, #tpu.memory_space<vmem>>, vector<16x128xf32>,
    return
  }
  func.func @transform_0(%arg0: i32, %arg1: i32) -> (i32, i32) {
    %c0_i32 = arith.constant 0 : i32
    %c0_i32_0 = arith.constant 0 : i32
    return %arg0, %c0_i32 : i32, i32
  }
  func.func @transform_1(%arg0: i32, %arg1: i32) -> (i32, i32) {
    %c0_i32 = arith.constant 0 : i32
    %c0_i32_0 = arith.constant 0 : i32
    %c0_i32_1 = arith.constant 0 : i32
    return %c0_i32, %c0_i32_0 : i32, i32
  }
  func.func @transform_2(%arg0: i32, %arg1: i32) -> (i32, i32) {
    %c0_i32 = arith.constant 0 : i32
    %c0_i32_0 = arith.constant 0 : i32
    %c0_i32_1 = arith.constant 0 : i32
    return %c0_i32, %c0_i32_0 : i32, i32
  }
  func.func @transform_3(%arg0: i32, %arg1: i32) -> (i32, i32) {
    %c0_i32 = arith.constant 0 : i32
    %c0_i32_0 = arith.constant 0 : i32
    return %c0_i32, %arg1 : i32, i32
  }
  func.func @transform_4(%arg0: i32, %arg1: i32) -> (i32, i32) {
    %c0_i32 = arith.constant 0 : i32
    %c0_i32_0 = arith.constant 0 : i32
    return %c0_i32, %arg1 : i32, i32
  }
  func.func @transform_5(%arg0: i32, %arg1: i32) -> (i32, i32) {
    %c0_i32 = arith.constant 0 : i32
    return %arg0, %arg1 : i32, i32
  }
}

</mosaic_0001>

<llo_original>
// kernel: prenorm.1
$region0: #{prenorm.1}
  #allocation0 [shape = 'u32[]', space=smem, size = 0x4, offset = 0x4, fixed_abs, tag = 'smem constant byte address 0x4 - core index']
  #allocation1 [shape = 'u32[144,128]{1,0:T(1,128)}', space=vmem, size = 0x12000, scoped, tag = 'internal scratch']
  %s0 = inlined_call_operand.vmem [shape: f32[16,128], index: 0, kind: input, shape index: {}]
  %s1 = inlined_call_operand.vmem [shape: f32[1,128], index: 1, kind: input, shape index: {}]
  %s2 = inlined_call_operand.vmem [shape: f32[1,128], index: 2, kind: input, shape index: {}]
  %s3 = inlined_call_operand.vmem [shape: f32[128,128], index: 3, kind: input, shape index: {}]
  %s4 = inlined_call_operand.vmem [shape: f32[1,128], index: 4, kind: input, shape index: {}]
  %s5 = inlined_call_operand.vmem [shape: f32[16,128], index: 5, kind: output, shape index: {}]
  %s6 = sld [smem:[#allocation0]]
  $region30: #{prenorm.1} parent=0
    _
  %s8 = ssub.s32 1, %s6
  %s9 = scalar_select 0, %s8, %s6
  // Predicated region
  $region2: #{prenorm.1} parent=0 // pred_check
    _
  $region3: #{prenorm.1} parent=0 // pred_check_branch
    %11 = sbr.rel (0) target = $region5
  $region4: #{prenorm.1} parent=0 // pred_region
    _
  $region5: #{prenorm.1} parent=0 // pred_fallthru
    _
  // Predicated region
  $region6: #{prenorm.1} parent=0 // pred_check
    _
  $region7: #{prenorm.1} parent=0 // pred_check_branch
    %13 = sbr.rel (0) target = $region9
  $region8: #{prenorm.1} parent=0 // pred_region
    _
  $region9: #{prenorm.1} parent=0 // pred_fallthru
    _
  // Predicated region
  $region10: #{prenorm.1} parent=0 // pred_check
    _
  $region11: #{prenorm.1} parent=0 // pred_check_branch
    %15 = sbr.rel (0) target = $region13
  $region12: #{prenorm.1} parent=0 // pred_region
    _
  $region13: #{prenorm.1} parent=0 // pred_fallthru
    _
  // Predicated region
  $region14: #{prenorm.1} parent=0 // pred_check
    _
  $region15: #{prenorm.1} parent=0 // pred_check_branch
    %17 = sbr.rel (0) target = $region17
  $region16: #{prenorm.1} parent=0 // pred_region
    _
  $region17: #{prenorm.1} parent=0 // pred_fallthru
    _
  // Predicated region
  $region18: #{prenorm.1} parent=0 // pred_check
    _
  $region19: #{prenorm.1} parent=0 // pred_check_branch
    %19 = sbr.rel (0) target = $region21
  $region20: #{prenorm.1} parent=0 // pred_region
    _
  $region21: #{prenorm.1} parent=0 // pred_fallthru
    _
  %v20 = vld [vmem:[%s0] sm:$0xff]
  %v21 = vld [vmem:[%s0 + $0x8] sm:$0xff]
  %v22 = vlaneseq
  %v23 = vand.u32 %v22, 127
  %vm24 = vcmp.lt.s32.totalorder %v23, 32
  %v25 = vsel %vm24, %v20, 0.0
  %v26 = vsel %vm24, %v21, 0.0
  %27 = vadd.xlane.f32.xlu0 %v25
  %v28 = vpop.xlane.xlu0 %27
  %29 = vadd.xlane.f32.xlu0 %v26
  %v30 = vpop.xlane.xlu0 %29
  %v31 = vmul.f32 %v28, 0.03125
  %v32 = vmul.f32 %v30, 0.03125
  %v33 = vsub.f32 %v25, %v31
  %v34 = vsub.f32 %v26, %v32
  %v35 = vsel %vm24, %v33, 0.0
  %v36 = vsel %vm24, %v34, 0.0
  %v37 = vmul.f32 %v35, %v35
  %v38 = vmul.f32 %v36, %v36
  %39 = vadd.xlane.f32.xlu0 %v37
  %v40 = vpop.xlane.xlu0 %39
  %41 = vadd.xlane.f32.xlu0 %v38
  %v42 = vpop.xlane.xlu0 %41
  %v43 = vmul.f32 %v40, 0.03125
  %v44 = vmul.f32 %v42, 0.03125
  %v45 = vadd.f32 %v43, 1e-05
  %v46 = vadd.f32 %v44, 1e-05
  %v47 = vrsqrt.pop %v45
  %v48 = vrsqrt.pop %v46
  %v49 = vmul.f32 %v35, %v47
  %v50 = vmul.f32 %v36, %v48
  %v51 = vld [vmem:[%s1] sm:$0x1]
  %v53 = vlaneseq
  %v54 = vshrl.u32 %v53, 7
  %v55 = vsub.s32 0, %v54
  %v56 = vrot.slane %v51, %v55
  %v58 = vmul.f32 %v49, %v56
  %v59 = vmul.f32 %v50, %v56
  %v60 = vld [vmem:[%s2] sm:$0x1]
  %v62 = vlaneseq
  %v63 = vshrl.u32 %v62, 7
  %v64 = vsub.s32 0, %v63
  %v65 = vrot.slane %v60, %v64
  %v67 = vadd.f32 %v58, %v65
  %v68 = vadd.f32 %v59, %v65
  %v69 = vld [vmem:[%s3] sm:$0xff]
  %v70 = vld [vmem:[%s3 + $0x8] sm:$0xff]
  %v71 = vld [vmem:[%s3 + $0x10] sm:$0xff]
  %v72 = vld [vmem:[%s3 + $0x18] sm:$0xff]
  %v73 = vld [vmem:[%s3 + $0x20] sm:$0xff]
  %v74 = vld [vmem:[%s3 + $0x28] sm:$0xff]
  %v75 = vld [vmem:[%s3 + $0x30] sm:$0xff]
  %v76 = vld [vmem:[%s3 + $0x38] sm:$0xff]
  %v77 = vld [vmem:[%s3 + $0x40] sm:$0xff]
  %v78 = vld [vmem:[%s3 + $0x48] sm:$0xff]
  %v79 = vld [vmem:[%s3 + $0x50] sm:$0xff]
  %v80 = vld [vmem:[%s3 + $0x58] sm:$0xff]
  %v81 = vld [vmem:[%s3 + $0x60] sm:$0xff]
  %v82 = vld [vmem:[%s3 + $0x68] sm:$0xff]
  %v83 = vld [vmem:[%s3 + $0x70] sm:$0xff]
  %v84 = vld [vmem:[%s3 + $0x78] sm:$0xff]
  %v85 = vld [vmem:[%s4] sm:$0x1]
  %v87 = vlaneseq
  %v88 = vshrl.u32 %v87, 7
  %v89 = vsub.s32 0, %v88
  %v90 = vrot.slane %v85, %v89
  %92 = vmatprep.subr.mxu0 0.0
  %93 = vmatpush1.msra.mxu0 %v84
  %94 = vmatprep.subr.mxu0 0.0
  %95 = vmatpush1.msra.mxu0 %v83
  %96 = vmatprep.subr.mxu0 0.0
  %97 = vmatpush1.msra.mxu0 %v82
  %98 = vmatprep.subr.mxu0 0.0
  %99 = vmatpush1.msra.mxu0 %v81
  %100 = vmatprep.subr.mxu0 0.0
  %101 = vmatpush1.msra.mxu0 %v80
  %102 = vmatprep.subr.mxu0 0.0
  %103 = vmatpush1.msra.mxu0 %v79
  %104 = vmatprep.subr.mxu0 0.0
  %105 = vmatpush1.msra.mxu0 %v78
  %106 = vmatprep.subr.mxu0 0.0
  %107 = vmatpush1.msra.mxu0 %v77
  %108 = vmatprep.subr.mxu0 0.0
  %109 = vmatpush1.msra.mxu0 %v76
  %110 = vmatprep.subr.mxu0 0.0
  %111 = vmatpush1.msra.mxu0 %v75
  %112 = vmatprep.subr.mxu0 0.0
  %113 = vmatpush1.msra.mxu0 %v74
  %114 = vmatprep.subr.mxu0 0.0
  %115 = vmatpush1.msra.mxu0 %v73
  %116 = vmatprep.subr.mxu0 0.0
  %117 = vmatpush1.msra.mxu0 %v72
  %118 = vmatprep.subr.mxu0 0.0
  %119 = vmatpush1.msra.mxu0 %v71
  %120 = vmatprep.subr.mxu0 0.0
  %121 = vmatpush1.msra.mxu0 %v70
  %122 = vmatprep.subr.mxu0 0.0
  %123 = vmatpush1.msra.mxu0 %v69
  %124 = vmatprep.subr.mxu0 0.0
  %125 = vmatpush2.msra.mxu0 0.0
  %126 = vmatprep.subr.mxu0 0.0
  %127 = vmatpush2.msra.mxu0 0.0
  %128 = vmatprep.subr.mxu0 0.0
  %129 = vmatpush2.msra.mxu0 0.0
  %130 = vmatprep.subr.mxu0 0.0
  %131 = vmatpush2.msra.mxu0 0.0
  %132 = vmatprep.subr.mxu0 0.0
  %133 = vmatpush2.msra.mxu0 0.0
  %134 = vmatprep.subr.mxu0 0.0
  %135 = vmatpush2.msra.mxu0 0.0
  %136 = vmatprep.subr.mxu0 0.0
  %137 = vmatpush2.msra.mxu0 0.0
  %138 = vmatprep.subr.mxu0 0.0
  %139 = vmatpush2.msra.mxu0 0.0
  %140 = vmatprep.subr.mxu0 0.0
  %141 = vmatpush2.msra.mxu0 0.0
  %142 = vmatprep.subr.mxu0 0.0
  %143 = vmatpush2.msra.mxu0 0.0
  %144 = vmatprep.subr.mxu0 0.0
  %145 = vmatpush2.msra.mxu0 0.0
  %146 = vmatprep.subr.mxu0 0.0
  %147 = vmatpush2.msra.mxu0 0.0
  %148 = vmatprep.subr.mxu0 0.0
  %149 = vmatpush2.msra.mxu0 0.0
  %150 = vmatprep.subr.mxu0 0.0
  %151 = vmatpush2.msra.mxu0 0.0
  %152 = vmatprep.subr.mxu0 0.0
  %153 = vmatpush2.msra.mxu0 0.0
  %154 = vmatprep.subr.mxu0 0.0
  %155 = vmatpush2.msra.mxu0 0.0
  %156 = vmatprep.mubr.f32.mxu0 0.0
  %157 = vmatmul.mubr.f32.gmra.mxu0 %v67
  %v158 = vpop.f32.mrf.mxu0
  %v159 = vadd.f32 %v90, %v158
  %v160 = vpop.f32.mrf.mxu0
  %161 = vmatprep.mubr.f32.mxu0 0.0
  %162 = vmatmul.mubr.f32.gmra.mxu0 %v68
  %v163 = vpop.f32.mrf.mxu0
  %v164 = vadd.f32 %v90, %v163
  %v165 = vpop.f32.mrf.mxu0
  %166 = vdwg.mxu0
  %167 = vst [vmem:[%s5] sm:$0xff] %v159
  %168 = vst [vmem:[%s5 + $0x8] sm:$0xff] %v164
  // Predicated region
  $region22: #{prenorm.1} parent=0 // pred_check
    _
  $region23: #{prenorm.1} parent=0 // pred_check_branch
    %170 = sbr.rel (0) target = $region25
  $region24: #{prenorm.1} parent=0 // pred_region
    _
  $region25: #{prenorm.1} parent=0 // pred_fallthru
    _
  // Predicated region
  $region26: #{prenorm.1} parent=0 // pred_check
    _
  $region27: #{prenorm.1} parent=0 // pred_check_branch
    %172 = sbr.rel (0) target = $region29
  $region28: #{prenorm.1} parent=0 // pred_region
    _
  $region29: #{prenorm.1} parent=0 // pred_fallthru
    _

</llo_original>
